<compile_context>
chip_gen: v6e
topology: v6e:2x2x1
jax: 0.10.0
libtpu: 0.0.40
codegen_flags: <defaults>
</compile_context>

<pallas_src>
import jax
import jax.numpy as jnp
from jax.experimental import pallas as pl
from jax.experimental.pallas import tpu as pltpu


_SMALL_FAST_PATH_BYTES = 256 << 10   # below this total output size, plain JAX add


def _vmem_budget():
    """(target_tile_bytes, vmem_limit_bytes) sized per TPU generation."""
    try:
        vmem_cap = pltpu.get_tpu_info().vmem_capacity_bytes
    except Exception:
        vmem_cap = 64 << 20   # conservative (v7x-class) fallback
    if vmem_cap >= (100 << 20):
        # v5e / v6e: 128 MiB physical VMEM -> big tiles, fewer grid steps.
        # Fused peak ~= 6 arrays x 2 buffers x 4 MiB = 48 MiB < 64 MiB limit.
        return 4 << 20, 64 << 20
    # v7x: 64 MiB physical per TC -> 2 MiB tiles (24 MiB fused peak), 48 MiB limit.
    return 2 << 20, 48 << 20


def _lane_dense_view_params(total):
    """Pick a lane-dense (rows, lane) factorization; pad if needed.

    Returns (padded_total, rows, lane, pad_elems)."""
    for lane in (1024, 512, 256, 128):
        if total % lane == 0:
            return total, total // lane, lane, 0
    # Not divisible by 128: pad the flat view up to the next multiple of 1024
    # so stores stay unmasked and lane-dense; slice the pad off afterwards.
    lane = 1024
    padded = ((total + lane - 1) // lane) * lane
    return padded, padded // lane, lane, padded - total


def _block_rows(rows, lane, max_itemsize, min_itemsize, target_tile_bytes):
    """Rows per block: VMEM-budget sized, sublane-pack aligned, >= ~4 grid steps."""
    # Sub-32-bit dtypes pack along sublanes: 8 rows (f32), 16 (bf16), 32 (int8/fp8).
    pack = max(8, 32 // max(1, int(min_itemsize)))
    rpb = (target_tile_bytes // (lane * max_itemsize)) // pack * pack
    rpb = max(pack, rpb)
    # Guarantee at least ~4 grid steps when the array is big enough to split,
    # so the "parallel" row axis shards across v7x's two TensorCores and the
    # auto-pipeliner has prologue/epilogue overlap.
    cap = (rows // 4) // pack * pack
    if cap >= pack:
        rpb = min(rpb, cap)
    if rpb >= rows:
        return rows
    return rpb


def _flatten_pad(x, padded_total):
    flat = x.reshape(-1)
    pad = padded_total - flat.shape[0]
    if pad:
        flat = jnp.pad(flat, (0, pad))
    return flat


def _add_kernel(a_ref, b_ref, o_ref):
    # In-kernel dtype promotion (free in the VPU slot of a DMA-bound kernel).
    o_ref[...] = a_ref[...].astype(o_ref.dtype) + b_ref[...].astype(o_ref.dtype)


def _fused_add_kernel(f1_ref, e1_ref, f2_ref, e2_ref, o1_ref, o2_ref):
    o1_ref[...] = f1_ref[...].astype(o1_ref.dtype) + e1_ref[...].astype(o1_ref.dtype)
    o2_ref[...] = f2_ref[...].astype(o2_ref.dtype) + e2_ref[...].astype(o2_ref.dtype)


def _pairwise_add(a, b):
    """Single lane-dense streamed add: out = a + b (shape of a, promoted dtype)."""
    out_dtype = jnp.result_type(a.dtype, b.dtype)
    total = a.size
    out_item = jnp.dtype(out_dtype).itemsize

    if total * out_item < _SMALL_FAST_PATH_BYTES:
        return a + b   # tiny: let XLA fuse it

    target_tile_bytes, vmem_limit = _vmem_budget()
    itemsizes = [jnp.dtype(a.dtype).itemsize, jnp.dtype(b.dtype).itemsize, out_item]
    max_item, min_item = max(itemsizes), min(itemsizes)

    padded, rows, lane, pad = _lane_dense_view_params(total)
    rpb = _block_rows(rows, lane, max_item, min_item, target_tile_bytes)

    a2 = _flatten_pad(a, padded).reshape(rows, lane)
    b2 = _flatten_pad(b, padded).reshape(rows, lane)
    spec = pl.BlockSpec((rpb, lane), lambda i: (i, 0))

    bytes_accessed = (a2.size * a2.dtype.itemsize
                      + b2.size * b2.dtype.itemsize
                      + padded * out_item)

    out = pl.pallas_call(
        _add_kernel,
        out_shape=jax.ShapeDtypeStruct((rows, lane), out_dtype),
        grid_spec=pltpu.PrefetchScalarGridSpec(
            num_scalar_prefetch=0,
            grid=(pl.cdiv(rows, rpb),),
            in_specs=[spec, spec],
            out_specs=spec,
        ),
        compiler_params=pltpu.CompilerParams(
            dimension_semantics=("parallel",),
            vmem_limit_bytes=vmem_limit,
        ),
        cost_estimate=pl.CostEstimate(
            flops=total, transcendentals=0, bytes_accessed=bytes_accessed),
    )(a2, b2)

    out_flat = out.reshape(-1)
    if pad:
        out_flat = out_flat[:total]
    return out_flat.reshape(a.shape)


def counter_guide(frame1, frame2, event1, event2):
    assert frame1.shape == event1.shape, "frame1/event1 shape mismatch"
    assert frame2.shape == event2.shape, "frame2/event2 shape mismatch"

    dt1 = jnp.result_type(frame1.dtype, event1.dtype)
    dt2 = jnp.result_type(frame2.dtype, event2.dtype)
    total1, total2 = frame1.size, frame2.size
    out_bytes = total1 * jnp.dtype(dt1).itemsize + total2 * jnp.dtype(dt2).itemsize

    # Tiny tensors: launch overhead dominates, and a plain add lets XLA fuse
    # this op into its producer/consumer (the only way to beat the roofline).
    if out_bytes < _SMALL_FAST_PATH_BYTES:
        return frame1 + event1, frame2 + event2

    # Fused single 4-in/2-out call only when both pairs share element count and
    # output dtype (identical block structure); otherwise two streamed adds
    # (same HBM traffic either way).
    if total1 != total2 or dt1 != dt2:
        return _pairwise_add(frame1, event1), _pairwise_add(frame2, event2)

    target_tile_bytes, vmem_limit = _vmem_budget()
    itemsizes = [jnp.dtype(x.dtype).itemsize
                 for x in (frame1, event1, frame2, event2)]
    out_item = jnp.dtype(dt1).itemsize
    max_item = max(itemsizes + [out_item])
    min_item = min(itemsizes + [out_item])

    padded, rows, lane, pad = _lane_dense_view_params(total1)
    rpb = _block_rows(rows, lane, max_item, min_item, target_tile_bytes)

    f1 = _flatten_pad(frame1, padded).reshape(rows, lane)
    e1 = _flatten_pad(event1, padded).reshape(rows, lane)
    f2 = _flatten_pad(frame2, padded).reshape(rows, lane)
    e2 = _flatten_pad(event2, padded).reshape(rows, lane)

    spec = pl.BlockSpec((rpb, lane), lambda i: (i, 0))
    out_sds = jax.ShapeDtypeStruct((rows, lane), dt1)

    bytes_accessed = (sum(x.size * x.dtype.itemsize for x in (f1, e1, f2, e2))
                      + 2 * padded * out_item)

    out1, out2 = pl.pallas_call(
        _fused_add_kernel,
        out_shape=(out_sds, out_sds),
        grid_spec=pltpu.PrefetchScalarGridSpec(
            num_scalar_prefetch=0,
            grid=(pl.cdiv(rows, rpb),),
            in_specs=[spec, spec, spec, spec],
            out_specs=[spec, spec],
        ),
        compiler_params=pltpu.CompilerParams(
            dimension_semantics=("parallel",),
            vmem_limit_bytes=vmem_limit,
        ),
        cost_estimate=pl.CostEstimate(
            flops=2 * total1, transcendentals=0, bytes_accessed=bytes_accessed),
    )(f1, e1, f2, e2)

    out1_flat = out1.reshape(-1)
    out2_flat = out2.reshape(-1)
    if pad:
        out1_flat = out1_flat[:total1]
        out2_flat = out2_flat[:total2]
    return out1_flat.reshape(frame1.shape), out2_flat.reshape(frame2.shape)


if __name__ == "__main__":
    key = jax.random.PRNGKey(0)
    k1, k2, k3, k4, k5, k6 = jax.random.split(key, 6)

    # 1) Main fused-kernel path: (batch, seq, hidden) big enough to leave the
    #    small-size fast path (256 KiB per tensor).
    B, N, C = 2, 128, 256
    frame1 = jax.random.normal(k1, (B, N, C), dtype=jnp.float32)
    frame2 = jax.random.normal(k2, (B, N, C), dtype=jnp.float32)
    event1 = jax.random.normal(k3, (B, N, C), dtype=jnp.float32)
    event2 = jax.random.normal(k4, (B, N, C), dtype=jnp.float32)

    out1, out2 = counter_guide(frame1, frame2, event1, event2)
    jax.block_until_ready((out1, out2))
    ref1, ref2 = frame1 + event1, frame2 + event2
    assert out1.shape == ref1.shape and out2.shape == ref2.shape
    assert jnp.allclose(out1, ref1), "fused out1 mismatch"
    assert jnp.allclose(out2, ref2), "fused out2 mismatch"

    # 2) Mixed-dtype path: event tensors in bf16 — exercises the in-kernel cast.
    event1_bf = event1.astype(jnp.bfloat16)
    event2_bf = event2.astype(jnp.bfloat16)
    m1, m2 = counter_guide(frame1, frame2, event1_bf, event2_bf)
    jax.block_until_ready((m1, m2))
    assert m1.dtype == jnp.float32 and m2.dtype == jnp.float32
    assert jnp.allclose(m1, frame1 + event1_bf), "mixed-dtype out1 mismatch"
    assert jnp.allclose(m2, frame2 + event2_bf), "mixed-dtype out2 mismatch"

    # 3) Odd element count (not divisible by 128) — exercises the pad path.
    fo1 = jax.random.normal(k5, (3, 129, 257), dtype=jnp.float32)
    eo1 = jax.random.normal(k6, (3, 129, 257), dtype=jnp.float32)
    o1, o2 = counter_guide(fo1, fo1 * 0.5, eo1, eo1 * 2.0)
    jax.block_until_ready((o1, o2))
    assert jnp.allclose(o1, fo1 + eo1), "padded out1 mismatch"
    assert jnp.allclose(o2, fo1 * 0.5 + eo1 * 2.0), "padded out2 mismatch"

    # 4) Tiny fast path (plain JAX add).
    tf1 = jax.random.normal(k1, (2, 8, 32), dtype=jnp.float32)
    te1 = jax.random.normal(k2, (2, 8, 32), dtype=jnp.float32)
    t1, t2 = counter_guide(tf1, tf1, te1, te1)
    jax.block_until_ready((t1, t2))
    assert jnp.allclose(t1, tf1 + te1) and jnp.allclose(t2, tf1 + te1)

    print("KERNEL_OK")
</pallas_src>

<mosaic_0001>
module attributes {stable_mosaic.version = 11 : i64} {
  func.func @_fused_add_kernel(%arg0: i32, %arg1: memref<16x1024xf32, #tpu.memory_space<vmem>>, %arg2: memref<16x1024xf32, #tpu.memory_space<vmem>>, %arg3: memref<16x1024xf32, #tpu.memory_space<vmem>>, %arg4: memref<16x1024xf32, #tpu.memory_space<vmem>>, %arg5: memref<16x1024xf32, #tpu.memory_space<vmem>>, %arg6: memref<16x1024xf32, #tpu.memory_space<vmem>>) attributes {dimension_semantics = [#tpu.dimension_semantics<parallel>], iteration_bounds = array<i64: 4>, scalar_prefetch = 0 : i64, scratch_operands = 0 : i64, tpu.core_type = #tpu.core_type<tc>, window_params = [{transform_indices = @transform_0, window_bounds = array<i64: 16, 1024>}, {transform_indices = @transform_1, window_bounds = array<i64: 16, 1024>}, {transform_indices = @transform_2, window_bounds = array<i64: 16, 1024>}, {transform_indices = @transform_3, window_bounds = array<i64: 16, 1024>}, {transform_indices = @transform_4, window_bounds = array<i64: 16, 1024>}, {transform_indices = @transform_5, window_bounds = array<i64: 16, 1024>}]} {
    %c0 = arith.constant 0 : index
    %c0_0 = arith.constant 0 : index
    %0 = vector.load %arg1[%c0, %c0_0] : memref<16x1024xf32, #tpu.memory_space<vmem>>, vector<16x1024xf32>
    %c0_1 = arith.constant 0 : index
    %c0_2 = arith.constant 0 : index
    %1 = vector.load %arg2[%c0_1, %c0_2] : memref<16x1024xf32, #tpu.memory_space<vmem>>, vector<16x1024xf32>
    %2 = arith.addf %0, %1 : vector<16x1024xf32>
    %c0_3 = arith.constant 0 : index
    %c0_4 = arith.constant 0 : index
    %3 = vector.load %arg5[%c0_3, %c0_4] : memref<16x1024xf32, #tpu.memory_space<vmem>>, vector<16x1024xf32>
    tpu.vector_store %arg5[%c0_3, %c0_4], %2 {strides = array<i32>} : memref<16x1024xf32, #tpu.memory_space<vmem>>, vector<16x1024xf32>,
    %c0_5 = arith.constant 0 : index
    %c0_6 = arith.constant 0 : index
    %4 = vector.load %arg3[%c0_5, %c0_6] : memref<16x1024xf32, #tpu.memory_space<vmem>>, vector<16x1024xf32>
    %c0_7 = arith.constant 0 : index
    %c0_8 = arith.constant 0 : index
    %5 = vector.load %arg4[%c0_7, %c0_8] : memref<16x1024xf32, #tpu.memory_space<vmem>>, vector<16x1024xf32>
    %6 = arith.addf %4, %5 : vector<16x1024xf32>
    %c0_9 = arith.constant 0 : index
    %c0_10 = arith.constant 0 : index
    %7 = vector.load %arg6[%c0_9, %c0_10] : memref<16x1024xf32, #tpu.memory_space<vmem>>, vector<16x1024xf32>
    tpu.vector_store %arg6[%c0_9, %c0_10], %6 {strides = array<i32>} : memref<16x1024xf32, #tpu.memory_space<vmem>>, vector<16x1024xf32>,
    return
  }
  func.func @transform_0(%arg0: i32) -> (i32, i32) {
    %c0_i32 = arith.constant 0 : i32
    %c0_i32_0 = arith.constant 0 : i32
    return %arg0, %c0_i32 : i32, i32
  }
  func.func @transform_1(%arg0: i32) -> (i32, i32) {
    %c0_i32 = arith.constant 0 : i32
    %c0_i32_0 = arith.constant 0 : i32
    return %arg0, %c0_i32 : i32, i32
  }
  func.func @transform_2(%arg0: i32) -> (i32, i32) {
    %c0_i32 = arith.constant 0 : i32
    %c0_i32_0 = arith.constant 0 : i32
    return %arg0, %c0_i32 : i32, i32
  }
  func.func @transform_3(%arg0: i32) -> (i32, i32) {
    %c0_i32 = arith.constant 0 : i32
    %c0_i32_0 = arith.constant 0 : i32
    return %arg0, %c0_i32 : i32, i32
  }
  func.func @transform_4(%arg0: i32) -> (i32, i32) {
    %c0_i32 = arith.constant 0 : i32
    %c0_i32_0 = arith.constant 0 : i32
    return %arg0, %c0_i32 : i32, i32
  }
  func.func @transform_5(%arg0: i32) -> (i32, i32) {
    %c0_i32 = arith.constant 0 : i32
    %c0_i32_0 = arith.constant 0 : i32
    return %arg0, %c0_i32 : i32, i32
  }
}

</mosaic_0001>

<llo_original>
// kernel: tpu_custom_call.1
$region0: #{tpu_custom_call.1}
  #allocation0 [shape = 'u32[]', space=smem, size = 0x4, offset = 0x4, fixed_abs, tag = 'smem constant byte address 0x4 - core index']
  #allocation1 [shape = 'u32[144,128]{1,0:T(1,128)}', space=vmem, size = 0x12000, scoped, tag = 'internal scratch']
  %s0 = inlined_call_operand.hbm [shape: f32[64,1024], index: 0, kind: input, shape index: {}]
  %s1 = inlined_call_operand.hbm [shape: f32[64,1024], index: 1, kind: input, shape index: {}]
  %s2 = inlined_call_operand.hbm [shape: f32[64,1024], index: 2, kind: input, shape index: {}]
  %s3 = inlined_call_operand.hbm [shape: f32[64,1024], index: 3, kind: input, shape index: {}]
  %s4 = inlined_call_operand.hbm [shape: f32[64,1024], index: 4, kind: output, shape index: {0}]
  %s5 = inlined_call_operand.hbm [shape: f32[64,1024], index: 5, kind: output, shape index: {1}]
  %6 = xla_tuple %s4, %s5
  %s7 = sld [smem:[#allocation0]]
  $region73: #{tpu_custom_call.1} parent=0
    _
  %s9 = ssub.s32 1, %s7
  %s10 = scalar_select 0, %s9, %s7
  $region1: #{tpu_custom_call.1} parent=0
    #allocation2 [shape = 'u8[131072]{0}', space=vmem, size = 0x20000, scoped, tag = 'input window, operand 0']
    #allocation3 [shape = 's32[2]{0}', space=sflag, size = 0x8, scoped, tag = 'scoped memory for tpu_custom_call.1']
    #allocation4 [shape = 's32[2]{0}', space=sflag, size = 0x8, scoped, tag = 'scoped memory for tpu_custom_call.1']
    #allocation5 [shape = 'u8[131072]{0}', space=vmem, size = 0x20000, scoped, tag = 'input window, operand 1']
    #allocation6 [shape = 's32[2]{0}', space=sflag, size = 0x8, scoped, tag = 'scoped memory for tpu_custom_call.1']
    #allocation7 [shape = 'u8[131072]{0}', space=vmem, size = 0x20000, scoped, tag = 'input window, operand 2']
    #allocation8 [shape = 'u8[131072]{0}', space=vmem, size = 0x20000, scoped, tag = 'input window, operand 3']
    #allocation9 [shape = 's32[2]{0}', space=sflag, size = 0x8, scoped, tag = 'scoped memory for tpu_custom_call.1']
    #allocation10 [shape = 'u8[131072]{0}', space=vmem, size = 0x20000, scoped, tag = 'output window, operand 0']
    #allocation11 [shape = 'u8[131072]{0}', space=vmem, size = 0x20000, scoped, tag = 'output window, operand 1']
    #allocation12 [shape = 's32[2]{0}', space=sflag, size = 0x8, scoped, tag = 'scoped memory for tpu_custom_call.1']
    %11 = vsyncpa [#allocation3], 0
    %s12 = scalar_lea.sflag [#allocation3], 1
    %13 = vsyncpa %s12, 0
    %14 = vsyncpa [#allocation6], 0
    %s15 = scalar_lea.sflag [#allocation6], 1
    %16 = vsyncpa %s15, 0
    %17 = vsyncpa [#allocation9], 0
    %s18 = scalar_lea.sflag [#allocation9], 1
    %19 = vsyncpa %s18, 0
    %20 = vsyncpa [#allocation4], 0
    %s21 = scalar_lea.sflag [#allocation4], 1
    %22 = vsyncpa %s21, 0
    %23 = vsyncpa [#allocation12], 0
    %s24 = scalar_lea.sflag [#allocation12], 1
    %25 = vsyncpa %s24, 0
    loop: start=0, step=1, limit=6
    $region2: #{tpu_custom_call.1} parent=1 // loop_pre_header
      _
    $region3: #{tpu_custom_call.1} parent=1 // loop_header
      %s27 = sphi 0, %s31
      %p28 = scmp.ge.s32.totalorder %s27, 6
      %s37 = sphi 0, %s39
      %s40 = sphi 0, %s37
      %s41 = sphi 0, %s40
      %s57 = sphi 0, %s41
      %s63 = sphi 0, %s65
      %s66 = sphi 0, %s63
      %s67 = sphi 0, %s66
      %s83 = sphi 0, %s67
      %s89 = sphi 0, %s91
      %s92 = sphi 0, %s89
      %s93 = sphi 0, %s92
      %s109 = sphi 0, %s93
      %s115 = sphi 0, %s117
      %s118 = sphi 0, %s115
      %s119 = sphi 0, %s118
      %s135 = sphi 0, %s119
      %s141 = sphi 0, %s143
      %s144 = sphi 0, %s141
      %s145 = sphi 0, %s144
      %s161 = sphi 0, %s145
      %s167 = sphi 0, %s169
      %s170 = sphi 0, %s167
      %s171 = sphi 0, %s170
      %s187 = sphi 0, %s171
    $region4: #{tpu_custom_call.1} parent=1 // loop_header_branch
      %30 = sbr.rel (%p28) target = $region8
    $region5: #{tpu_custom_call.1} parent=1 // loop_body
      %s32 = ssub.s32 %s27, 1
      %s33 = ssub.s32 %s27, 2
      %s34 = sadd.s32 %s27, 1
      %s35 = ssub.s32 %s27, %s34
      %p36 = scmp.eq.s32.totalorder %s35, 0
      %s38 = sadd.s32 %s37, 1
      %s39 = scalar_select %p36, %s37, %s38
      %p42 = pneg %p36
      %p43 = scmp.eq.s32.totalorder %s27, 3
      %p44 = por %p42, %p43
      %p45 = scmp.ne.s32.totalorder %s37, %s40
      %p46 = scmp.eq.s32.totalorder %s27, 0
      %p47 = por %p45, %p46
      %p48 = scmp.ne.s32.totalorder %s37, %s40
      %p49 = scmp.eq.s32.totalorder %s32, 3
      %p50 = por %p48, %p49
      %p51 = scmp.ne.s32.totalorder %s40, %s41
      %p52 = scmp.eq.s32.totalorder %s32, 0
      %p53 = por %p51, %p52
      %p54 = scmp.ne.s32.totalorder %s40, %s41
      %p55 = scmp.eq.s32.totalorder %s33, 3
      %p56 = por %p54, %p55
      %p58 = scmp.ne.s32.totalorder %s41, %s57
      %p59 = scmp.eq.s32.totalorder %s33, 0
      %p60 = por %p58, %p59
      %s61 = ssub.s32 %s27, %s34
      %p62 = scmp.eq.s32.totalorder %s61, 0
      %s64 = sadd.s32 %s63, 1
      %s65 = scalar_select %p62, %s63, %s64
      %p68 = pneg %p62
      %p69 = scmp.eq.s32.totalorder %s27, 3
      %p70 = por %p68, %p69
      %p71 = scmp.ne.s32.totalorder %s63, %s66
      %p72 = scmp.eq.s32.totalorder %s27, 0
      %p73 = por %p71, %p72
      %p74 = scmp.ne.s32.totalorder %s63, %s66
      %p75 = scmp.eq.s32.totalorder %s32, 3
      %p76 = por %p74, %p75
      %p77 = scmp.ne.s32.totalorder %s66, %s67
      %p78 = scmp.eq.s32.totalorder %s32, 0
      %p79 = por %p77, %p78
      %p80 = scmp.ne.s32.totalorder %s66, %s67
      %p81 = scmp.eq.s32.totalorder %s33, 3
      %p82 = por %p80, %p81
      %p84 = scmp.ne.s32.totalorder %s67, %s83
      %p85 = scmp.eq.s32.totalorder %s33, 0
      %p86 = por %p84, %p85
      %s87 = ssub.s32 %s27, %s34
      %p88 = scmp.eq.s32.totalorder %s87, 0
      %s90 = sadd.s32 %s89, 1
      %s91 = scalar_select %p88, %s89, %s90
      %p94 = pneg %p88
      %p95 = scmp.eq.s32.totalorder %s27, 3
      %p96 = por %p94, %p95
      %p97 = scmp.ne.s32.totalorder %s89, %s92
      %p98 = scmp.eq.s32.totalorder %s27, 0
      %p99 = por %p97, %p98
      %p100 = scmp.ne.s32.totalorder %s89, %s92
      %p101 = scmp.eq.s32.totalorder %s32, 3
      %p102 = por %p100, %p101
      %p103 = scmp.ne.s32.totalorder %s92, %s93
      %p104 = scmp.eq.s32.totalorder %s32, 0
      %p105 = por %p103, %p104
      %p106 = scmp.ne.s32.totalorder %s92, %s93
      %p107 = scmp.eq.s32.totalorder %s33, 3
      %p108 = por %p106, %p107
      %p110 = scmp.ne.s32.totalorder %s93, %s109
      %p111 = scmp.eq.s32.totalorder %s33, 0
      %p112 = por %p110, %p111
      %s113 = ssub.s32 %s27, %s34
      %p114 = scmp.eq.s32.totalorder %s113, 0
      %s116 = sadd.s32 %s115, 1
      %s117 = scalar_select %p114, %s115, %s116
      %p120 = pneg %p114
      %p121 = scmp.eq.s32.totalorder %s27, 3
      %p122 = por %p120, %p121
      %p123 = scmp.ne.s32.totalorder %s115, %s118
      %p124 = scmp.eq.s32.totalorder %s27, 0
      %p125 = por %p123, %p124
      %p126 = scmp.ne.s32.totalorder %s115, %s118
      %p127 = scmp.eq.s32.totalorder %s32, 3
      %p128 = por %p126, %p127
      %p129 = scmp.ne.s32.totalorder %s118, %s119
      %p130 = scmp.eq.s32.totalorder %s32, 0
      %p131 = por %p129, %p130
      %p132 = scmp.ne.s32.totalorder %s118, %s119
      %p133 = scmp.eq.s32.totalorder %s33, 3
      %p134 = por %p132, %p133
      %p136 = scmp.ne.s32.totalorder %s119, %s135
      %p137 = scmp.eq.s32.totalorder %s33, 0
      %p138 = por %p136, %p137
      %s139 = ssub.s32 %s27, %s34
      %p140 = scmp.eq.s32.totalorder %s139, 0
      %s142 = sadd.s32 %s141, 1
      %s143 = scalar_select %p140, %s141, %s142
      %p146 = pneg %p140
      %p147 = scmp.eq.s32.totalorder %s27, 3
      %p148 = por %p146, %p147
      %p149 = scmp.ne.s32.totalorder %s141, %s144
      %p150 = scmp.eq.s32.totalorder %s27, 0
      %p151 = por %p149, %p150
      %p152 = scmp.ne.s32.totalorder %s141, %s144
      %p153 = scmp.eq.s32.totalorder %s32, 3
      %p154 = por %p152, %p153
      %p155 = scmp.ne.s32.totalorder %s144, %s145
      %p156 = scmp.eq.s32.totalorder %s32, 0
      %p157 = por %p155, %p156
      %p158 = scmp.ne.s32.totalorder %s144, %s145
      %p159 = scmp.eq.s32.totalorder %s33, 3
      %p160 = por %p158, %p159
      %p162 = scmp.ne.s32.totalorder %s145, %s161
      %p163 = scmp.eq.s32.totalorder %s33, 0
      %p164 = por %p162, %p163
      %s165 = ssub.s32 %s27, %s34
      %p166 = scmp.eq.s32.totalorder %s165, 0
      %s168 = sadd.s32 %s167, 1
      %s169 = scalar_select %p166, %s167, %s168
      %p172 = pneg %p166
      %p173 = scmp.eq.s32.totalorder %s27, 3
      %p174 = por %p172, %p173
      %p175 = scmp.ne.s32.totalorder %s167, %s170
      %p176 = scmp.eq.s32.totalorder %s27, 0
      %p177 = por %p175, %p176
      %p178 = scmp.ne.s32.totalorder %s167, %s170
      %p179 = scmp.eq.s32.totalorder %s32, 3
      %p180 = por %p178, %p179
      %p181 = scmp.ne.s32.totalorder %s170, %s171
      %p182 = scmp.eq.s32.totalorder %s32, 0
      %p183 = por %p181, %p182
      %p184 = scmp.ne.s32.totalorder %s170, %s171
      %p185 = scmp.eq.s32.totalorder %s33, 3
      %p186 = por %p184, %p185
      %p188 = scmp.ne.s32.totalorder %s171, %s187
      %p189 = scmp.eq.s32.totalorder %s33, 0
      %p190 = por %p188, %p189
      %p191 = scmp.le.s32.totalorder 1, %s27
      %p192 = scmp.lt.s32.totalorder %s27, 5
      %p193 = pnand %p191, %p192
      %p194 = pneg %p193
      // Predicated region
      $region9: #{tpu_custom_call.1} parent=5 // pred_check
        _
      $region10: #{tpu_custom_call.1} parent=5 // pred_check_branch
        %196 = sbr.rel (%p193) target = $region12
      $region11: #{tpu_custom_call.1} parent=5 // pred_region
        %s197 = ssub.s32 %s27, 1
      $region12: #{tpu_custom_call.1} parent=5 // pred_fallthru
        _
      %p198 = scmp.lt.s32.totalorder %s27, 4
      // Predicated region
      $region13: #{tpu_custom_call.1} parent=5 // pred_check
        %p199 = pneg %p198
      $region14: #{tpu_custom_call.1} parent=5 // pred_check_branch
        %201 = sbr.rel (%p199) target = $region16
      $region15: #{tpu_custom_call.1} parent=5 // pred_region
        // Predicated region
        $region17: #{tpu_custom_call.1} parent=15 // pred_check
          %p202 = pneg %p47
        $region18: #{tpu_custom_call.1} parent=15 // pred_check_branch
          %204 = sbr.rel (%p202) target = $region20
        $region19: #{tpu_custom_call.1} parent=15 // pred_region
          %s205 = sand.u32 %s37, 1
          %s206 = scalar_lea.sflag [#allocation3], %s205
          %s207 = sand.u32 %s37, 1
          %s208 = smul.addr %s207, 128
          %s209 = scalar_lea.vmem [#allocation2], %s208
          %s210 = smul.u32 2, %s27
          %s212 = ssub.s32 2048, 2048
          %213 = vsyncadd %s206, %s212
          %s214 = smul.addr %s210, 8
          %s215 = smul.addr %s214, 128
          %s216 = scalar_lea.hbm %s0, %s215
          %s217 = sshll.u32 %s209, 4
          %s218 = int_to_ptr.vmem [resolvable:$true] %s217
          %223 = dma.hbm_to_vmem [thread:$0]  %s216, 2048, %s218, %s206, 1024, 1024, 64
        $region20: #{tpu_custom_call.1} parent=15 // pred_fallthru
          _
        // Predicated region
        $region21: #{tpu_custom_call.1} parent=15 // pred_check
          %p224 = pneg %p73
        $region22: #{tpu_custom_call.1} parent=15 // pred_check_branch
          %226 = sbr.rel (%p224) target = $region24
        $region23: #{tpu_custom_call.1} parent=15 // pred_region
          %s227 = sand.u32 %s27, 1
          %s228 = scalar_lea.sflag [#allocation6], %s227
          %s229 = sand.u32 %s63, 1
          %s230 = smul.addr %s229, 128
          %s231 = scalar_lea.vmem [#allocation5], %s230
          %s232 = smul.u32 2, %s27
          %s234 = ssub.s32 2048, 2048
          %235 = vsyncadd %s228, %s234
          %s236 = smul.addr %s232, 8
          %s237 = smul.addr %s236, 128
          %s238 = scalar_lea.hbm %s1, %s237
          %s239 = sshll.u32 %s231, 4
          %s240 = int_to_ptr.vmem [resolvable:$true] %s239
          %245 = dma.hbm_to_vmem [thread:$0]  %s238, 2048, %s240, %s228, 1024, 1024, 64
        $region24: #{tpu_custom_call.1} parent=15 // pred_fallthru
          _
        // Predicated region
        $region25: #{tpu_custom_call.1} parent=15 // pred_check
          %p246 = pneg %p99
        $region26: #{tpu_custom_call.1} parent=15 // pred_check_branch
          %248 = sbr.rel (%p246) target = $region28
        $region27: #{tpu_custom_call.1} parent=15 // pred_region
          %s249 = sand.u32 %s27, 1
          %s250 = scalar_lea.sflag [#allocation6], %s249
          %s251 = sand.u32 %s89, 1
          %s252 = smul.addr %s251, 128
          %s253 = scalar_lea.vmem [#allocation7], %s252
          %s254 = smul.u32 2, %s27
          %s256 = ssub.s32 2048, 2048
          %257 = vsyncadd %s250, %s256
          %s258 = smul.addr %s254, 8
          %s259 = smul.addr %s258, 128
          %s260 = scalar_lea.hbm %s2, %s259
          %s261 = sshll.u32 %s253, 4
          %s262 = int_to_ptr.vmem [resolvable:$true] %s261
          %267 = dma.hbm_to_vmem [thread:$0]  %s260, 2048, %s262, %s250, 1024, 1024, 64
        $region28: #{tpu_custom_call.1} parent=15 // pred_fallthru
          _
        // Predicated region
        $region29: #{tpu_custom_call.1} parent=15 // pred_check
          %p268 = pneg %p125
        $region30: #{tpu_custom_call.1} parent=15 // pred_check_branch
          %270 = sbr.rel (%p268) target = $region32
        $region31: #{tpu_custom_call.1} parent=15 // pred_region
          %s271 = sand.u32 %s115, 1
          %s272 = scalar_lea.sflag [#allocation9], %s271
          %s273 = sand.u32 %s115, 1
          %s274 = smul.addr %s273, 128
          %s275 = scalar_lea.vmem [#allocation8], %s274
          %s276 = smul.u32 2, %s27
          %s278 = ssub.s32 2048, 2048
          %279 = vsyncadd %s272, %s278
          %s280 = smul.addr %s276, 8
          %s281 = smul.addr %s280, 128
          %s282 = scalar_lea.hbm %s3, %s281
          %s283 = sshll.u32 %s275, 4
          %s284 = int_to_ptr.vmem [resolvable:$true] %s283
          %289 = dma.hbm_to_vmem [thread:$0]  %s282, 2048, %s284, %s272, 1024, 1024, 64
        $region32: #{tpu_custom_call.1} parent=15 // pred_fallthru
          _
      $region16: #{tpu_custom_call.1} parent=5 // pred_fallthru
        _
      %p290 = scmp.le.s32.totalorder 1, %s27
      %p291 = scmp.lt.s32.totalorder %s27, 5
      %p292 = pnand %p290, %p291
      %p293 = pneg %p292
      // Predicated region
      $region33: #{tpu_custom_call.1} parent=5 // pred_check
        _
      $region34: #{tpu_custom_call.1} parent=5 // pred_check_branch
        %295 = sbr.rel (%p292) target = $region36
      $region35: #{tpu_custom_call.1} parent=5 // pred_region
        %s296 = ssub.s32 %s27, 1
        %s297 = sand.u32 %s40, 1
        %s298 = scalar_lea.sflag [#allocation3], %s297
        %s299 = sand.u32 %s40, 1
        %s300 = smul.addr %s299, 128
        %s301 = scalar_lea.vmem [#allocation2], %s300
        // Predicated region
        $region37: #{tpu_custom_call.1} parent=35 // pred_check
          %p302 = pneg %p53
        $region38: #{tpu_custom_call.1} parent=35 // pred_check_branch
          %304 = sbr.rel (%p302) target = $region40
        $region39: #{tpu_custom_call.1} parent=35 // pred_region
          %305 = dma.done %s298, 2048
        $region40: #{tpu_custom_call.1} parent=35 // pred_fallthru
          _
        %s306 = sand.u32 %s32, 1
        %s307 = scalar_lea.sflag [#allocation6], %s306
        %s308 = sand.u32 %s66, 1
        %s309 = smul.addr %s308, 128
        %s310 = scalar_lea.vmem [#allocation5], %s309
        // Predicated region
        $region41: #{tpu_custom_call.1} parent=35 // pred_check
          %p311 = pneg %p79
        $region42: #{tpu_custom_call.1} parent=35 // pred_check_branch
          %313 = sbr.rel (%p311) target = $region44
        $region43: #{tpu_custom_call.1} parent=35 // pred_region
          %314 = dma.done %s307, 2048
        $region44: #{tpu_custom_call.1} parent=35 // pred_fallthru
          _
        %s315 = sand.u32 %s32, 1
        %s316 = scalar_lea.sflag [#allocation6], %s315
        %s317 = sand.u32 %s92, 1
        %s318 = smul.addr %s317, 128
        %s319 = scalar_lea.vmem [#allocation7], %s318
        // Predicated region
        $region45: #{tpu_custom_call.1} parent=35 // pred_check
          %p320 = pneg %p105
        $region46: #{tpu_custom_call.1} parent=35 // pred_check_branch
          %322 = sbr.rel (%p320) target = $region48
        $region47: #{tpu_custom_call.1} parent=35 // pred_region
          %323 = dma.done %s316, 2048
        $region48: #{tpu_custom_call.1} parent=35 // pred_fallthru
          _
        %s324 = sand.u32 %s118, 1
        %s325 = scalar_lea.sflag [#allocation9], %s324
        %s326 = sand.u32 %s118, 1
        %s327 = smul.addr %s326, 128
        %s328 = scalar_lea.vmem [#allocation8], %s327
        // Predicated region
        $region49: #{tpu_custom_call.1} parent=35 // pred_check
          %p329 = pneg %p131
        $region50: #{tpu_custom_call.1} parent=35 // pred_check_branch
          %331 = sbr.rel (%p329) target = $region52
        $region51: #{tpu_custom_call.1} parent=35 // pred_region
          %332 = dma.done %s325, 2048
        $region52: #{tpu_custom_call.1} parent=35 // pred_fallthru
          _
        %s333 = sand.u32 %s40, 1
        %s334 = scalar_lea.sflag [#allocation3], %s333
        %s335 = sand.u32 %s40, 1
        %s336 = smul.addr %s335, 128
        %s337 = scalar_lea.vmem [#allocation2], %s336
        %p338 = pneg %p53
        %p339 = pneg %p50
        %s340 = sand.u32 %s32, 1
        %s341 = scalar_lea.sflag [#allocation6], %s340
        %s342 = sand.u32 %s66, 1
        %s343 = smul.addr %s342, 128
        %s344 = scalar_lea.vmem [#allocation5], %s343
        %p345 = pneg %p79
        %p346 = pneg %p76
        %s347 = sand.u32 %s32, 1
        %s348 = scalar_lea.sflag [#allocation6], %s347
        %s349 = sand.u32 %s92, 1
        %s350 = smul.addr %s349, 128
        %s351 = scalar_lea.vmem [#allocation7], %s350
        %p352 = pneg %p105
        %p353 = pneg %p102
        %s354 = sand.u32 %s118, 1
        %s355 = scalar_lea.sflag [#allocation9], %s354
        %s356 = sand.u32 %s118, 1
        %s357 = smul.addr %s356, 128
        %s358 = scalar_lea.vmem [#allocation8], %s357
        %p359 = pneg %p131
        %p360 = pneg %p128
        %p361 = pneg %p157
        %p362 = pneg %p154
        %s363 = sand.u32 %s144, 1
        %s364 = scalar_lea.sflag [#allocation4], %s363
        %s365 = sand.u32 %s144, 1
        %s366 = smul.addr %s365, 128
        %s367 = scalar_lea.vmem [#allocation10], %s366
        %p368 = pneg %p183
        %p369 = pneg %p180
        %s370 = sand.u32 %s170, 1
        %s371 = scalar_lea.sflag [#allocation12], %s370
        %s372 = sand.u32 %s170, 1
        %s373 = smul.addr %s372, 128
        %s374 = scalar_lea.vmem [#allocation11], %s373
        %s375 = smul.u32 2, %s32
        %s376 = smul.u32 2, %s32
        %s377 = smul.u32 2, %s32
        %s378 = smul.u32 2, %s32
        %s379 = smul.u32 2, %s32
        %s380 = smul.u32 2, %s32
        %v381 = vld [vmem:[%s301] sm:$0xff]
        %v382 = vld [vmem:[%s301 + $0x8] sm:$0xff]
        %v383 = vld [vmem:[%s301 + $0x10] sm:$0xff]
        %v384 = vld [vmem:[%s301 + $0x18] sm:$0xff]
        %v385 = vld [vmem:[%s301 + $0x20] sm:$0xff]
        %v386 = vld [vmem:[%s301 + $0x28] sm:$0xff]
        %v387 = vld [vmem:[%s301 + $0x30] sm:$0xff]
        %v388 = vld [vmem:[%s301 + $0x38] sm:$0xff]
        %v389 = vld [vmem:[%s301 + $0x40] sm:$0xff]
        %v390 = vld [vmem:[%s301 + $0x48] sm:$0xff]
        %v391 = vld [vmem:[%s301 + $0x50] sm:$0xff]
        %v392 = vld [vmem:[%s301 + $0x58] sm:$0xff]
        %v393 = vld [vmem:[%s301 + $0x60] sm:$0xff]
        %v394 = vld [vmem:[%s301 + $0x68] sm:$0xff]
        %v395 = vld [vmem:[%s301 + $0x70] sm:$0xff]
        %v396 = vld [vmem:[%s301 + $0x78] sm:$0xff]
        %v397 = vld [vmem:[%s310] sm:$0xff]
        %v398 = vld [vmem:[%s310 + $0x8] sm:$0xff]
        %v399 = vld [vmem:[%s310 + $0x10] sm:$0xff]
        %v400 = vld [vmem:[%s310 + $0x18] sm:$0xff]
        %v401 = vld [vmem:[%s310 + $0x20] sm:$0xff]
        %v402 = vld [vmem:[%s310 + $0x28] sm:$0xff]
        %v403 = vld [vmem:[%s310 + $0x30] sm:$0xff]
        %v404 = vld [vmem:[%s310 + $0x38] sm:$0xff]
        %v405 = vld [vmem:[%s310 + $0x40] sm:$0xff]
        %v406 = vld [vmem:[%s310 + $0x48] sm:$0xff]
        %v407 = vld [vmem:[%s310 + $0x50] sm:$0xff]
        %v408 = vld [vmem:[%s310 + $0x58] sm:$0xff]
        %v409 = vld [vmem:[%s310 + $0x60] sm:$0xff]
        %v410 = vld [vmem:[%s310 + $0x68] sm:$0xff]
        %v411 = vld [vmem:[%s310 + $0x70] sm:$0xff]
        %v412 = vld [vmem:[%s310 + $0x78] sm:$0xff]
        %v413 = vadd.f32 %v381, %v397
        %v414 = vadd.f32 %v382, %v398
        %v415 = vadd.f32 %v383, %v399
        %v416 = vadd.f32 %v384, %v400
        %v417 = vadd.f32 %v385, %v401
        %v418 = vadd.f32 %v386, %v402
        %v419 = vadd.f32 %v387, %v403
        %v420 = vadd.f32 %v388, %v404
        %v421 = vadd.f32 %v389, %v405
        %v422 = vadd.f32 %v390, %v406
        %v423 = vadd.f32 %v391, %v407
        %v424 = vadd.f32 %v392, %v408
        %v425 = vadd.f32 %v393, %v409
        %v426 = vadd.f32 %v394, %v410
        %v427 = vadd.f32 %v395, %v411
        %v428 = vadd.f32 %v396, %v412
        %429 = vst [vmem:[%s367] sm:$0xff] %v413
        %430 = vst [vmem:[%s367 + $0x8] sm:$0xff] %v414
        %431 = vst [vmem:[%s367 + $0x10] sm:$0xff] %v415
        %432 = vst [vmem:[%s367 + $0x18] sm:$0xff] %v416
        %433 = vst [vmem:[%s367 + $0x20] sm:$0xff] %v417
        %434 = vst [vmem:[%s367 + $0x28] sm:$0xff] %v418
        %435 = vst [vmem:[%s367 + $0x30] sm:$0xff] %v419
        %436 = vst [vmem:[%s367 + $0x38] sm:$0xff] %v420
        %437 = vst [vmem:[%s367 + $0x40] sm:$0xff] %v421
        %438 = vst [vmem:[%s367 + $0x48] sm:$0xff] %v422
        %439 = vst [vmem:[%s367 + $0x50] sm:$0xff] %v423
        %440 = vst [vmem:[%s367 + $0x58] sm:$0xff] %v424
        %441 = vst [vmem:[%s367 + $0x60] sm:$0xff] %v425
        %442 = vst [vmem:[%s367 + $0x68] sm:$0xff] %v426
        %443 = vst [vmem:[%s367 + $0x70] sm:$0xff] %v427
        %444 = vst [vmem:[%s367 + $0x78] sm:$0xff] %v428
        %v445 = vld [vmem:[%s319] sm:$0xff]
        %v446 = vld [vmem:[%s319 + $0x8] sm:$0xff]
        %v447 = vld [vmem:[%s319 + $0x10] sm:$0xff]
        %v448 = vld [vmem:[%s319 + $0x18] sm:$0xff]
        %v449 = vld [vmem:[%s319 + $0x20] sm:$0xff]
        %v450 = vld [vmem:[%s319 + $0x28] sm:$0xff]
        %v451 = vld [vmem:[%s319 + $0x30] sm:$0xff]
        %v452 = vld [vmem:[%s319 + $0x38] sm:$0xff]
        %v453 = vld [vmem:[%s319 + $0x40] sm:$0xff]
        %v454 = vld [vmem:[%s319 + $0x48] sm:$0xff]
        %v455 = vld [vmem:[%s319 + $0x50] sm:$0xff]
        %v456 = vld [vmem:[%s319 + $0x58] sm:$0xff]
        %v457 = vld [vmem:[%s319 + $0x60] sm:$0xff]
        %v458 = vld [vmem:[%s319 + $0x68] sm:$0xff]
        %v459 = vld [vmem:[%s319 + $0x70] sm:$0xff]
        %v460 = vld [vmem:[%s319 + $0x78] sm:$0xff]
        %v461 = vld [vmem:[%s328] sm:$0xff]
        %v462 = vld [vmem:[%s328 + $0x8] sm:$0xff]
        %v463 = vld [vmem:[%s328 + $0x10] sm:$0xff]
        %v464 = vld [vmem:[%s328 + $0x18] sm:$0xff]
        %v465 = vld [vmem:[%s328 + $0x20] sm:$0xff]
        %v466 = vld [vmem:[%s328 + $0x28] sm:$0xff]
        %v467 = vld [vmem:[%s328 + $0x30] sm:$0xff]
        %v468 = vld [vmem:[%s328 + $0x38] sm:$0xff]
        %v469 = vld [vmem:[%s328 + $0x40] sm:$0xff]
        %v470 = vld [vmem:[%s328 + $0x48] sm:$0xff]
        %v471 = vld [vmem:[%s328 + $0x50] sm:$0xff]
        %v472 = vld [vmem:[%s328 + $0x58] sm:$0xff]
        %v473 = vld [vmem:[%s328 + $0x60] sm:$0xff]
        %v474 = vld [vmem:[%s328 + $0x68] sm:$0xff]
        %v475 = vld [vmem:[%s328 + $0x70] sm:$0xff]
        %v476 = vld [vmem:[%s328 + $0x78] sm:$0xff]
        %v477 = vadd.f32 %v445, %v461
        %v478 = vadd.f32 %v446, %v462
        %v479 = vadd.f32 %v447, %v463
        %v480 = vadd.f32 %v448, %v464
        %v481 = vadd.f32 %v449, %v465
        %v482 = vadd.f32 %v450, %v466
        %v483 = vadd.f32 %v451, %v467
        %v484 = vadd.f32 %v452, %v468
        %v485 = vadd.f32 %v453, %v469
        %v486 = vadd.f32 %v454, %v470
        %v487 = vadd.f32 %v455, %v471
        %v488 = vadd.f32 %v456, %v472
        %v489 = vadd.f32 %v457, %v473
        %v490 = vadd.f32 %v458, %v474
        %v491 = vadd.f32 %v459, %v475
        %v492 = vadd.f32 %v460, %v476
        %493 = vst [vmem:[%s374] sm:$0xff] %v477
        %494 = vst [vmem:[%s374 + $0x8] sm:$0xff] %v478
        %495 = vst [vmem:[%s374 + $0x10] sm:$0xff] %v479
        %496 = vst [vmem:[%s374 + $0x18] sm:$0xff] %v480
        %497 = vst [vmem:[%s374 + $0x20] sm:$0xff] %v481
        %498 = vst [vmem:[%s374 + $0x28] sm:$0xff] %v482
        %499 = vst [vmem:[%s374 + $0x30] sm:$0xff] %v483
        %500 = vst [vmem:[%s374 + $0x38] sm:$0xff] %v484
        %501 = vst [vmem:[%s374 + $0x40] sm:$0xff] %v485
        %502 = vst [vmem:[%s374 + $0x48] sm:$0xff] %v486
        %503 = vst [vmem:[%s374 + $0x50] sm:$0xff] %v487
        %504 = vst [vmem:[%s374 + $0x58] sm:$0xff] %v488
        %505 = vst [vmem:[%s374 + $0x60] sm:$0xff] %v489
        %506 = vst [vmem:[%s374 + $0x68] sm:$0xff] %v490
        %507 = vst [vmem:[%s374 + $0x70] sm:$0xff] %v491
        %508 = vst [vmem:[%s374 + $0x78] sm:$0xff] %v492
        %s509 = sand.u32 %s144, 1
        %s510 = scalar_lea.sflag [#allocation4], %s509
        %s511 = sand.u32 %s144, 1
        %s512 = smul.addr %s511, 128
        %s513 = scalar_lea.vmem [#allocation10], %s512
        %s514 = sand.u32 %s170, 1
        %s515 = scalar_lea.sflag [#allocation12], %s514
        %s516 = sand.u32 %s170, 1
        %s517 = smul.addr %s516, 128
        %s518 = scalar_lea.vmem [#allocation11], %s517
        // Predicated region
        $region53: #{tpu_custom_call.1} parent=35 // pred_check
          %p519 = pneg %p154
        $region54: #{tpu_custom_call.1} parent=35 // pred_check_branch
          %521 = sbr.rel (%p519) target = $region56
        $region55: #{tpu_custom_call.1} parent=35 // pred_region
          %s522 = smul.u32 2, %s32
          %s524 = ssub.s32 2048, 2048
          %525 = vsyncadd %s510, %s524
          %s526 = smul.addr %s522, 8
          %s527 = smul.addr %s526, 128
          %s528 = scalar_lea.hbm %s4, %s527
          %s529 = sshll.u32 %s513, 4
          %s530 = int_to_ptr.vmem [resolvable:$true] %s529
          %535 = dma.vmem_to_hbm [thread:$0]  %s530, 2048, %s528, %s510, 1024, 1024, 64
        $region56: #{tpu_custom_call.1} parent=35 // pred_fallthru
          _
        // Predicated region
        $region57: #{tpu_custom_call.1} parent=35 // pred_check
          %p536 = pneg %p180
        $region58: #{tpu_custom_call.1} parent=35 // pred_check_branch
          %538 = sbr.rel (%p536) target = $region60
        $region59: #{tpu_custom_call.1} parent=35 // pred_region
          %s539 = smul.u32 2, %s32
          %s541 = ssub.s32 2048, 2048
          %542 = vsyncadd %s515, %s541
          %s543 = smul.addr %s539, 8
          %s544 = smul.addr %s543, 128
          %s545 = scalar_lea.hbm %s5, %s544
          %s546 = sshll.u32 %s518, 4
          %s547 = int_to_ptr.vmem [resolvable:$true] %s546
          %552 = dma.vmem_to_hbm [thread:$0]  %s547, 2048, %s545, %s515, 1024, 1024, 64
        $region60: #{tpu_custom_call.1} parent=35 // pred_fallthru
          _
      $region36: #{tpu_custom_call.1} parent=5 // pred_fallthru
        _
      %p553 = scmp.le.s32.totalorder 2, %s27
      // Predicated region
      $region61: #{tpu_custom_call.1} parent=5 // pred_check
        %p554 = pneg %p553
      $region62: #{tpu_custom_call.1} parent=5 // pred_check_branch
        %556 = sbr.rel (%p554) target = $region64
      $region63: #{tpu_custom_call.1} parent=5 // pred_region
        %s557 = ssub.s32 %s27, 2
        // Predicated region
        $region65: #{tpu_custom_call.1} parent=63 // pred_check
          %p558 = pneg %p160
        $region66: #{tpu_custom_call.1} parent=63 // pred_check_branch
          %560 = sbr.rel (%p558) target = $region68
        $region67: #{tpu_custom_call.1} parent=63 // pred_region
          %s561 = sand.u32 %s145, 1
          %s562 = scalar_lea.sflag [#allocation4], %s561
          %s563 = sand.u32 %s145, 1
          %s564 = smul.addr %s563, 128
          %s565 = scalar_lea.vmem [#allocation10], %s564
          %566 = dma.done %s562, 2048
        $region68: #{tpu_custom_call.1} parent=63 // pred_fallthru
          _
        // Predicated region
        $region69: #{tpu_custom_call.1} parent=63 // pred_check
          %p567 = pneg %p186
        $region70: #{tpu_custom_call.1} parent=63 // pred_check_branch
          %569 = sbr.rel (%p567) target = $region72
        $region71: #{tpu_custom_call.1} parent=63 // pred_region
          %s570 = sand.u32 %s171, 1
          %s571 = scalar_lea.sflag [#allocation12], %s570
          %s572 = sand.u32 %s171, 1
          %s573 = smul.addr %s572, 128
          %s574 = scalar_lea.vmem [#allocation11], %s573
          %575 = dma.done %s571, 2048
        $region72: #{tpu_custom_call.1} parent=63 // pred_fallthru
          _
      $region64: #{tpu_custom_call.1} parent=5 // pred_fallthru
        _
    $region6: #{tpu_custom_call.1} parent=1 // loop_footer
      %s31 = sadd.s32 1, %s27
    $region7: #{tpu_custom_call.1} parent=1 // loop_footer_branch
      %26 = sbr.rel target = $region3
    $region8: #{tpu_custom_call.1} parent=1 // loop_exit
      _
    %576 = vsyncpa [#allocation3], 1
    %s577 = scalar_lea.sflag [#allocation3], 1
    %578 = vsyncpa %s577, 1
    %579 = vsyncpa [#allocation6], 1
    %s580 = scalar_lea.sflag [#allocation6], 1
    %581 = vsyncpa %s580, 1
    %582 = vsyncpa [#allocation9], 1
    %s583 = scalar_lea.sflag [#allocation9], 1
    %584 = vsyncpa %s583, 1
    %585 = vsyncpa [#allocation4], 1
    %s586 = scalar_lea.sflag [#allocation4], 1
    %587 = vsyncpa %s586, 1
    %588 = vsyncpa [#allocation12], 1
    %s589 = scalar_lea.sflag [#allocation12], 1
    %590 = vsyncpa %s589, 1

</llo_original>
